<compile_context>
chip_gen: v5e
topology: v5e:2x2
jax: 0.10.0
libtpu: 0.0.40
codegen_flags: <defaults>
</compile_context>

<pallas_src>
import jax
import jax.numpy as jnp
from jax import lax
from jax.experimental import pallas as pl
from jax.experimental.pallas import tpu as pltpu


def _mock_model_kernel(x_ref, y_ref, w_ref, b_ref, o_ref):
    # s = x + y  (VPU; replaces an entire second MXU pass)
    s = x_ref[...] + y_ref[...]                        # (B, Din)
    # (B, Din) . (Dout, Din), contracting Din of both -> (B, Dout).
    acc = lax.dot_general(
        s,
        w_ref[...],
        dimension_numbers=(((1,), (1,)), ((), ())),
        preferred_element_type=jnp.float32,
    )
    # The original module adds the bias on each branch -> 2*b total.
    o_ref[...] = (acc + 2.0 * b_ref[...]).astype(o_ref.dtype)


def mock_model_forward(x, y, w, b):
    """x, y: (B, 10) float32; w: (10, 10) [out_features, in_features]; b: (10,)."""
    B, Din = x.shape
    Dout = w.shape[0]
    b2d = b.reshape(1, Dout)  # lane-major bias row

    vmem = pl.BlockSpec(memory_space=pltpu.MemorySpace.VMEM)

    return pl.pallas_call(
        _mock_model_kernel,
        out_shape=jax.ShapeDtypeStruct((B, Dout), x.dtype),
        in_specs=[vmem, vmem, vmem, vmem],
        out_specs=vmem,
    )(x, y, w, b2d)


if __name__ == "__main__":
    key = jax.random.PRNGKey(0)
    kx, ky, kw, kb = jax.random.split(key, 4)

    B, D = 8, 10  # batch=8; nn.Linear(10, 10) implies feature dim 10
    x = jax.random.normal(kx, (B, D), dtype=jnp.float32)
    y = jax.random.normal(ky, (B, D), dtype=jnp.float32)

    # Deterministic parameter init mimicking torch.nn.Linear default:
    # uniform(-1/sqrt(in_features), 1/sqrt(in_features)) for weight and bias.
    bound = 1.0 / jnp.sqrt(jnp.float32(D))
    w = jax.random.uniform(kw, (D, D), dtype=jnp.float32, minval=-bound, maxval=bound)
    b = jax.random.uniform(kb, (D,), dtype=jnp.float32, minval=-bound, maxval=bound)

    out = mock_model_forward(x, y, w, b)
    out = jax.block_until_ready(out)

    # Pure-JAX reference (the original two-matmul formulation).
    ref = (x @ w.T + b) + (y @ w.T + b)
    assert out.shape == (B, D)
    assert jnp.allclose(out, ref, atol=1e-5, rtol=1e-5), "mismatch vs reference"

    print("KERNEL_OK")
</pallas_src>

<mosaic_0001>
module attributes {stable_mosaic.version = 11 : i64} {
  func.func @_mock_model_kernel(%arg0: memref<8x10xf32, #tpu.memory_space<vmem>>, %arg1: memref<8x10xf32, #tpu.memory_space<vmem>>, %arg2: memref<10x10xf32, #tpu.memory_space<vmem>>, %arg3: memref<1x10xf32, #tpu.memory_space<vmem>>, %arg4: memref<8x10xf32, #tpu.memory_space<vmem>>) attributes {dimension_semantics = [], scalar_prefetch = 0 : i64, scratch_operands = 0 : i64, tpu.core_type = #tpu.core_type<tc>} {
    %c0 = arith.constant 0 : index
    %c0_0 = arith.constant 0 : index
    %0 = vector.load %arg0[%c0, %c0_0] : memref<8x10xf32, #tpu.memory_space<vmem>>, vector<8x10xf32>
    %c0_1 = arith.constant 0 : index
    %c0_2 = arith.constant 0 : index
    %1 = vector.load %arg1[%c0_1, %c0_2] : memref<8x10xf32, #tpu.memory_space<vmem>>, vector<8x10xf32>
    %2 = arith.addf %0, %1 : vector<8x10xf32>
    %c0_3 = arith.constant 0 : index
    %c0_4 = arith.constant 0 : index
    %3 = vector.load %arg2[%c0_3, %c0_4] : memref<10x10xf32, #tpu.memory_space<vmem>>, vector<10x10xf32>
    %cst = arith.constant dense<0.000000e+00> : vector<8x10xf32>
    %4 = tpu.matmul %2, %3, %cst {dimension_numbers = #tpu.dot_dimension_numbers<[1], [1], [0], [0], [0, 0, 1, 0], [], []>} : vector<8x10xf32>, vector<10x10xf32>, vector<8x10xf32> -> vector<8x10xf32>
    %c0_5 = arith.constant 0 : index
    %c0_6 = arith.constant 0 : index
    %5 = vector.load %arg3[%c0_5, %c0_6] : memref<1x10xf32, #tpu.memory_space<vmem>>, vector<1x10xf32>
    %cst_7 = arith.constant 2.000000e+00 : f32
    %6 = vector.broadcast %cst_7 : f32 to vector<1x10xf32>
    %7 = arith.mulf %6, %5 : vector<1x10xf32>
    %8 = vector.broadcast %7 : vector<1x10xf32> to vector<8x10xf32>
    %9 = arith.addf %4, %8 : vector<8x10xf32>
    %c0_8 = arith.constant 0 : index
    %c0_9 = arith.constant 0 : index
    %10 = vector.load %arg4[%c0_8, %c0_9] : memref<8x10xf32, #tpu.memory_space<vmem>>, vector<8x10xf32>
    tpu.vector_store %arg4[%c0_8, %c0_9], %9 {strides = array<i32>} : memref<8x10xf32, #tpu.memory_space<vmem>>, vector<8x10xf32>,
    return
  }
}

</mosaic_0001>

<llo_original>
// kernel: tpu_custom_call.1
$region0: #{tpu_custom_call.1}
  #allocation0 [shape = 'u32[]', space=smem, size = 0x4, offset = 0x4, fixed_abs, tag = 'smem constant byte address 0x4 - core index']
  #allocation1 [shape = 'u32[72,128]{1,0:T(1,128)}', space=vmem, size = 0x9000, scoped, tag = 'internal scratch']
  %s0 = inlined_call_operand.hbm [shape: f32[8,10], index: 0, kind: input, shape index: {}]
  %s1 = inlined_call_operand.hbm [shape: f32[8,10], index: 1, kind: input, shape index: {}]
  %s2 = inlined_call_operand.hbm [shape: f32[10,10], index: 2, kind: input, shape index: {}]
  %s3 = inlined_call_operand.vmem [shape: f32[1,10], index: 3, kind: input, shape index: {}]
  %s4 = inlined_call_operand.hbm [shape: f32[8,10], index: 4, kind: output, shape index: {}]
  %s5 = sld [smem:[#allocation0]]
  $region38: #{tpu_custom_call.1} parent=0
    _
  %s7 = ssub.s32 1, %s5
  %s8 = scalar_select 0, %s7, %s5
  $region1: #{tpu_custom_call.1} parent=0
    #allocation2 [shape = 'u8[4096]{0}', space=vmem, size = 0x1000, scoped, tag = 'input window, operand 0, single buffered']
    #allocation3 [shape = 's32[1]{0}', space=sflag, size = 0x4, scoped, tag = 'scoped memory for tpu_custom_call.1']
    #allocation4 [shape = 's32[1]{0}', space=sflag, size = 0x4, scoped, tag = 'scoped memory for tpu_custom_call.1']
    #allocation5 [shape = 'u8[4096]{0}', space=vmem, size = 0x1000, scoped, tag = 'input window, operand 1, single buffered']
    #allocation6 [shape = 's32[1]{0}', space=sflag, size = 0x4, scoped, tag = 'scoped memory for tpu_custom_call.1']
    #allocation7 [shape = 'u8[8192]{0}', space=vmem, size = 0x2000, scoped, tag = 'input window, operand 2, single buffered']
    #allocation8 [shape = 'u8[4096]{0}', space=vmem, size = 0x1000, scoped, tag = 'output window, operand 0, single buffered']
    %9 = vsyncpa [#allocation3], 0
    %10 = vsyncpa [#allocation6], 0
    %11 = vsyncpa [#allocation4], 0
    // Predicated region
    $region2: #{tpu_custom_call.1} parent=1 // pred_check
      _
    $region3: #{tpu_custom_call.1} parent=1 // pred_check_branch
      %13 = sbr.rel (0) target = $region5
    $region4: #{tpu_custom_call.1} parent=1 // pred_region
      %15 = vsyncadd [#allocation3], 0
      %s17 = sshll.u32 %s0, 4
      %s18 = int_to_ptr.hbm [resolvable:$true] %s17
      %s19 = sshll.u32 [#allocation2], 4
      %s20 = int_to_ptr.vmem [resolvable:$true] %s19
      %22 = dma.hbm_to_vmem [thread:$0]  %s18, 128, %s20, [#allocation3]
    $region5: #{tpu_custom_call.1} parent=1 // pred_fallthru
      _
    // Predicated region
    $region6: #{tpu_custom_call.1} parent=1 // pred_check
      _
    $region7: #{tpu_custom_call.1} parent=1 // pred_check_branch
      %24 = sbr.rel (0) target = $region9
    $region8: #{tpu_custom_call.1} parent=1 // pred_region
      %26 = vsyncadd [#allocation6], 0
      %s28 = sshll.u32 %s1, 4
      %s29 = int_to_ptr.hbm [resolvable:$true] %s28
      %s30 = sshll.u32 [#allocation5], 4
      %s31 = int_to_ptr.vmem [resolvable:$true] %s30
      %33 = dma.hbm_to_vmem [thread:$0]  %s29, 128, %s31, [#allocation6]
    $region9: #{tpu_custom_call.1} parent=1 // pred_fallthru
      _
    // Predicated region
    $region10: #{tpu_custom_call.1} parent=1 // pred_check
      _
    $region11: #{tpu_custom_call.1} parent=1 // pred_check_branch
      %35 = sbr.rel (0) target = $region13
    $region12: #{tpu_custom_call.1} parent=1 // pred_region
      %37 = vsyncadd [#allocation6], 0
      %s38 = sshll.u32 %s2, 4
      %s39 = int_to_ptr.hbm [resolvable:$true] %s38
      %s40 = sshll.u32 [#allocation7], 4
      %s41 = int_to_ptr.vmem [resolvable:$true] %s40
      %46 = dma.hbm_to_vmem [thread:$0]  %s39, 256, %s41, [#allocation6], 128, 128, 8
    $region13: #{tpu_custom_call.1} parent=1 // pred_fallthru
      _
    // Predicated region
    $region14: #{tpu_custom_call.1} parent=1 // pred_check
      _
    $region15: #{tpu_custom_call.1} parent=1 // pred_check_branch
      %48 = sbr.rel (0) target = $region17
    $region16: #{tpu_custom_call.1} parent=1 // pred_region
      _
    $region17: #{tpu_custom_call.1} parent=1 // pred_fallthru
      _
    // Predicated region
    $region18: #{tpu_custom_call.1} parent=1 // pred_check
      _
    $region19: #{tpu_custom_call.1} parent=1 // pred_check_branch
      %50 = sbr.rel (0) target = $region21
    $region20: #{tpu_custom_call.1} parent=1 // pred_region
      %52 = dma.done [#allocation3], 128
    $region21: #{tpu_custom_call.1} parent=1 // pred_fallthru
      _
    // Predicated region
    $region22: #{tpu_custom_call.1} parent=1 // pred_check
      _
    $region23: #{tpu_custom_call.1} parent=1 // pred_check_branch
      %54 = sbr.rel (0) target = $region25
    $region24: #{tpu_custom_call.1} parent=1 // pred_region
      %56 = dma.done [#allocation6], 128
    $region25: #{tpu_custom_call.1} parent=1 // pred_fallthru
      _
    // Predicated region
    $region26: #{tpu_custom_call.1} parent=1 // pred_check
      _
    $region27: #{tpu_custom_call.1} parent=1 // pred_check_branch
      %58 = sbr.rel (0) target = $region29
    $region28: #{tpu_custom_call.1} parent=1 // pred_region
      %60 = dma.done [#allocation6], 256
    $region29: #{tpu_custom_call.1} parent=1 // pred_fallthru
      _
    %v61 = vld [vmem:[#allocation2] sm:$0xff]
    %v62 = vld [vmem:[#allocation5] sm:$0xff]
    %v63 = vadd.f32 %v61, %v62
    %v64 = vld [vmem:[#allocation7] sm:$0xff]
    %v65 = vld [vmem:[#allocation7 + $0x8] sm:$0x3]
    %v66 = vld [vmem:[%s3] sm:$0x1]
    %v67 = vmul.f32 %v66, 2.0
    %v69 = vperm.slane %v67, 0
    %vm71 = vcmask 80896
    %v73 = vsel %vm71, %v63, 0
    %v76 = vsel %vm71, %v64, 0
    %v79 = vsel %vm71, %v65, 0
    %81 = vmatpush.xpose.msra.mxu0 0.0
    %82 = vmatpush.xpose.msra.mxu0 0.0
    %83 = vmatpush.xpose.msra.mxu0 0.0
    %84 = vmatpush.xpose.msra.mxu0 0.0
    %85 = vmatpush.xpose.msra.mxu0 0.0
    %86 = vmatpush.xpose.msra.mxu0 0.0
    %87 = vmatpush.xpose.msra.mxu0 0.0
    %88 = vmatpush.xpose.msra.mxu0 0.0
    %89 = vmatpush.xpose.msra.mxu0 0.0
    %90 = vmatpush.xpose.msra.mxu0 0.0
    %91 = vmatpush.xpose.msra.mxu0 0.0
    %92 = vmatpush.xpose.msra.mxu0 0.0
    %93 = vmatpush.xpose.msra.mxu0 0.0
    %94 = vmatpush.xpose.msra.mxu0 0.0
    %95 = vmatpush.xpose.msra.mxu0 %v79
    %96 = vmatpush.xpose.msra.mxu0 %v76
    %97 = vmatmul.f32.gmra.mxu0 %v73
    %v98 = vpop.f32.mrf.mxu0
    %v99 = vadd.f32 %v69, %v98
    %100 = vdwg.mxu0
    %101 = vst.msk [vmem:[#allocation8] sm:$0xff] %vm71, %v99
    // Predicated region
    $region30: #{tpu_custom_call.1} parent=1 // pred_check
      _
    $region31: #{tpu_custom_call.1} parent=1 // pred_check_branch
      %103 = sbr.rel (0) target = $region33
    $region32: #{tpu_custom_call.1} parent=1 // pred_region
      %105 = vsyncadd [#allocation4], 0
      %s107 = sshll.u32 [#allocation8], 4
      %s108 = int_to_ptr.vmem [resolvable:$true] %s107
      %s109 = sshll.u32 %s4, 4
      %s110 = int_to_ptr.hbm [resolvable:$true] %s109
      %112 = dma.vmem_to_hbm [thread:$0]  %s108, 128, %s110, [#allocation4]
    $region33: #{tpu_custom_call.1} parent=1 // pred_fallthru
      _
    // Predicated region
    $region34: #{tpu_custom_call.1} parent=1 // pred_check
      _
    $region35: #{tpu_custom_call.1} parent=1 // pred_check_branch
      %114 = sbr.rel (0) target = $region37
    $region36: #{tpu_custom_call.1} parent=1 // pred_region
      %116 = dma.done [#allocation4], 128
    $region37: #{tpu_custom_call.1} parent=1 // pred_fallthru
      _
    %117 = vsyncpa [#allocation3], 1
    %118 = vsyncpa [#allocation6], 1
    %119 = vsyncpa [#allocation4], 1

</llo_original>
